<compile_context>
chip_gen: v7x
topology: tpu7x:2x2x1
jax: 0.10.0
libtpu: 0.0.40
codegen_flags: <defaults>
</compile_context>

<pallas_src>
import jax
import jax.numpy as jnp
from jax import lax
from jax.experimental import pallas as pl
from jax.experimental.pallas import tpu as pltpu


HIDDEN_PAD = 128                 # hidden width 100 rounded up to one lane tile
TB_CAP = 8192                    # hard cap on the batch (lane) tile
VMEM_BUDGET_BYTES = 20 << 20     # budget for x/out buffers + intermediates
VMEM_LIMIT_BYTES = 32 << 20      # scoped-VMEM limit (safe on v5e/v6e/v7x)


def _round_up(n, m):
    return ((n + m - 1) // m) * m


def _cdiv(a, b):
    return (a + b - 1) // b


def _choose_tiling(B, D):
    """Balanced batch tiling under a VMEM budget.

    Per lane column the kernel materializes ~2 KiB of f32/bf16 intermediates
    (h1, h1 bf16 copy, h2, h2*w3) plus ~12*D bytes of x-related buffers
    (double-buffered f32 input tile, bf16 cast, transposed copy) and the
    output row.  tb is the largest 128-multiple that fits the budget, capped
    at TB_CAP; tiles are then balanced across the grid so worst-case padding
    is < 128 lanes per tile.  For B > 256 we force >= 2 grid steps so v7x's
    two TensorCores both get work.
    """
    per_col = 2048 + 12 * D + 16
    tb_fit = max(128, (VMEM_BUDGET_BYTES // per_col) // 128 * 128)
    tb_max = min(TB_CAP, tb_fit)

    nt = max(1, _cdiv(max(B, 1), tb_max))
    if B > 256 and nt < 2:
        nt = 2                                   # megacore sharding on v7x
    tb = _round_up(_cdiv(max(B, 1), nt), 128)
    Bp = nt * tb
    return nt, tb, Bp


def _deepsurv_kernel(x_ref, w1_ref, b1_ref, w2_ref, b2_ref, w3_ref, b3_ref, o_ref):
    # x_ref : (TB, D)  f32  (natural layout; cast + "transpose" happen here)
    # w1_ref: (Hp, D)  bf16 ; w2_ref: (Hp, Hp) bf16   (transposed weights)
    # b1/b2 : (Hp, 1)  f32  ; w3: (Hp, 1) f32 ; b3: (1, 1) f32
    # o_ref : (1, TB)  f32  (lane-dense output)
    x = x_ref[...].astype(jnp.bfloat16)

    # fc1 + bias + relu, computed transposed: (Hp, D) . (TB, D)^T -> (Hp, TB).
    # (Contraction on the last dim of both operands == q@k^T pattern.)
    h1 = lax.dot_general(
        w1_ref[...], x,
        dimension_numbers=(((1,), (1,)), ((), ())),
        preferred_element_type=jnp.float32) + b1_ref[...]
    h1 = jnp.maximum(h1, 0.0)

    # fc2 + bias + relu (dropout == identity at inference)
    h2 = jnp.dot(w2_ref[...], h1.astype(jnp.bfloat16),
                 preferred_element_type=jnp.float32) + b2_ref[...]
    h2 = jnp.maximum(h2, 0.0)

    # output layer: single real column -> VPU multiply + sublane (XLU) reduce.
    # Padded hidden rows are exactly zero, so the math is exact; padded batch
    # lanes carry finite garbage and are sliced away by the wrapper.
    o_ref[...] = jnp.sum(h2 * w3_ref[...], axis=0, keepdims=True) + b3_ref[...]


def prepare_params(params, hp=HIDDEN_PAD):
    """One-time prep: transpose, zero-pad hidden dim to `hp`, cast matmul
    weights to bf16.  Weights in `params` are stored (in, out); biases (out,)."""
    w1, b1, w2, b2, w3, b3 = params
    D, H = w1.shape
    w1_t = jnp.zeros((hp, D), jnp.bfloat16).at[:H, :].set(w1.T.astype(jnp.bfloat16))
    b1_c = jnp.zeros((hp, 1), jnp.float32).at[:H, 0].set(b1.astype(jnp.float32))
    w2_t = jnp.zeros((hp, hp), jnp.bfloat16).at[:H, :H].set(w2.T.astype(jnp.bfloat16))
    b2_c = jnp.zeros((hp, 1), jnp.float32).at[:H, 0].set(b2.astype(jnp.float32))
    w3_c = jnp.zeros((hp, 1), jnp.float32).at[:H, :].set(w3.astype(jnp.float32))
    b3_c = jnp.reshape(b3, (1, 1)).astype(jnp.float32)
    return (w1_t, b1_c, w2_t, b2_c, w3_c, b3_c)


def deepsurv_forward(x, prepped):
    """x: (B, input_dim) float32 -> (B,) float32 (matches .squeeze(-1))."""
    w1_t, b1_c, w2_t, b2_c, w3_c, b3_c = prepped
    B, D = x.shape
    Hp = w1_t.shape[0]

    nt, tb, Bp = _choose_tiling(B, D)

    # Only a row-pad (no transpose, no cast), and only when B isn't aligned.
    x_p = x if Bp == B else jnp.pad(x, ((0, Bp - B), (0, 0)))

    weight_bytes = (w1_t.size + w2_t.size) * 2 + (b1_c.size + b2_c.size
                                                  + w3_c.size + b3_c.size) * 4

    out = pl.pallas_call(
        _deepsurv_kernel,
        out_shape=jax.ShapeDtypeStruct((1, Bp), jnp.float32),
        grid=(nt,),
        in_specs=[
            pl.BlockSpec((tb, D), lambda i: (i, 0)),     # x tile moves with batch
            pl.BlockSpec((Hp, D), lambda i: (0, 0)),     # weights stay VMEM-resident
            pl.BlockSpec((Hp, 1), lambda i: (0, 0)),
            pl.BlockSpec((Hp, Hp), lambda i: (0, 0)),
            pl.BlockSpec((Hp, 1), lambda i: (0, 0)),
            pl.BlockSpec((Hp, 1), lambda i: (0, 0)),
            pl.BlockSpec((1, 1), lambda i: (0, 0)),
        ],
        out_specs=pl.BlockSpec((1, tb), lambda i: (0, i)),   # lane-dense output
        compiler_params=pltpu.CompilerParams(
            dimension_semantics=("parallel",),               # batch tiles independent
            vmem_limit_bytes=VMEM_LIMIT_BYTES,
        ),
        cost_estimate=pl.CostEstimate(
            flops=2 * Bp * (D * Hp + Hp * Hp + Hp),
            transcendentals=0,
            bytes_accessed=Bp * D * 4 + Bp * 4 + weight_bytes,
        ),
    )(x_p, w1_t, b1_c, w2_t, b2_c, w3_c, b3_c)

    return out[0, :B]


def init_params(key, input_dim, hidden=100, out=1):
    """Deterministic init mirroring nn.Linear defaults (U(-1/sqrt(fan_in), +...)).
    Weights stored as (in, out) = transpose of PyTorch's (out, in)."""
    ks = jax.random.split(key, 6)

    def linear(kw, kb, fan_in, fan_out):
        bound = 1.0 / jnp.sqrt(float(fan_in))
        w = jax.random.uniform(kw, (fan_in, fan_out), jnp.float32, -bound, bound)
        b = jax.random.uniform(kb, (fan_out,), jnp.float32, -bound, bound)
        return w, b

    w1, b1 = linear(ks[0], ks[1], input_dim, hidden)
    w2, b2 = linear(ks[2], ks[3], hidden, hidden)
    w3, b3 = linear(ks[4], ks[5], hidden, out)
    return (w1, b1, w2, b2, w3, b3)


def deepsurv_reference(x, params):
    w1, b1, w2, b2, w3, b3 = params
    h = jnp.maximum(x @ w1 + b1, 0.0)
    h = jnp.maximum(h @ w2 + b2, 0.0)
    return (h @ w3 + b3)[..., 0]


if __name__ == "__main__":
    key = jax.random.PRNGKey(0)
    k_x, k_p, k_x2 = jax.random.split(key, 3)

    input_dim = 16
    params = init_params(k_p, input_dim)
    prepped = prepare_params(params)          # one-time weight prep (hoisted)

    # Small single-tile case.
    B = 2
    x = jax.random.normal(k_x, (B, input_dim), jnp.float32)
    out = jax.block_until_ready(deepsurv_forward(x, prepped))
    ref = deepsurv_reference(x, params)
    assert out.shape == (B,)
    # bf16 matmul inputs with f32 accumulation -> loosened tolerance vs f32 ref.
    assert jnp.allclose(out, ref, atol=3e-2, rtol=3e-2), (out, ref)

    # Multi-tile case (exercises balanced tiling, row-pad path, 2-step grid).
    B2 = 300
    x2 = jax.random.normal(k_x2, (B2, input_dim), jnp.float32)
    out2 = jax.block_until_ready(deepsurv_forward(x2, prepped))
    ref2 = deepsurv_reference(x2, params)
    assert out2.shape == (B2,)
    assert jnp.allclose(out2, ref2, atol=3e-2, rtol=3e-2)

    print("KERNEL_OK")
</pallas_src>

<mosaic_0001>
module attributes {stable_mosaic.version = 11 : i64} {
  func.func @_deepsurv_kernel(%arg0: i32, %arg1: memref<128x16xf32, #tpu.memory_space<vmem>>, %arg2: memref<128x16xbf16, #tpu.memory_space<vmem>>, %arg3: memref<128x1xf32, #tpu.memory_space<vmem>>, %arg4: memref<128x128xbf16, #tpu.memory_space<vmem>>, %arg5: memref<128x1xf32, #tpu.memory_space<vmem>>, %arg6: memref<128x1xf32, #tpu.memory_space<vmem>>, %arg7: memref<1x1xf32, #tpu.memory_space<vmem>>, %arg8: memref<1x128xf32, #tpu.memory_space<vmem>>) attributes {dimension_semantics = [#tpu.dimension_semantics<parallel>], iteration_bounds = array<i64: 1>, scalar_prefetch = 0 : i64, scratch_operands = 0 : i64, tpu.core_type = #tpu.core_type<tc>, window_params = [{transform_indices = @transform_0, window_bounds = array<i64: 128, 16>}, {pipeline_mode = #tpu.pipeline_mode<synchronous>, transform_indices = @transform_1, window_bounds = array<i64: 128, 16>}, {pipeline_mode = #tpu.pipeline_mode<synchronous>, transform_indices = @transform_2, window_bounds = array<i64: 128, 1>}, {pipeline_mode = #tpu.pipeline_mode<synchronous>, transform_indices = @transform_3, window_bounds = array<i64: 128, 128>}, {pipeline_mode = #tpu.pipeline_mode<synchronous>, transform_indices = @transform_4, window_bounds = array<i64: 128, 1>}, {pipeline_mode = #tpu.pipeline_mode<synchronous>, transform_indices = @transform_5, window_bounds = array<i64: 128, 1>}, {pipeline_mode = #tpu.pipeline_mode<synchronous>, transform_indices = @transform_6, window_bounds = array<i64: 1, 1>}, {transform_indices = @transform_7, window_bounds = array<i64: 1, 128>}]} {
    %c0 = arith.constant 0 : index
    %c0_0 = arith.constant 0 : index
    %0 = vector.load %arg1[%c0, %c0_0] : memref<128x16xf32, #tpu.memory_space<vmem>>, vector<128x16xf32>
    %1 = arith.truncf %0 : vector<128x16xf32> to vector<128x16xbf16>
    %c0_1 = arith.constant 0 : index
    %c0_2 = arith.constant 0 : index
    %2 = vector.load %arg2[%c0_1, %c0_2] : memref<128x16xbf16, #tpu.memory_space<vmem>>, vector<128x16xbf16>
    %cst = arith.constant dense<0.000000e+00> : vector<128x128xf32>
    %3 = tpu.matmul %2, %1, %cst {dimension_numbers = #tpu.dot_dimension_numbers<[1], [1], [0], [0], [0, 0, 1, 0], [], []>} : vector<128x16xbf16>, vector<128x16xbf16>, vector<128x128xf32> -> vector<128x128xf32>
    %c0_3 = arith.constant 0 : index
    %c0_4 = arith.constant 0 : index
    %4 = vector.load %arg3[%c0_3, %c0_4] : memref<128x1xf32, #tpu.memory_space<vmem>>, vector<128x1xf32>
    %5 = vector.broadcast %4 : vector<128x1xf32> to vector<128x128xf32>
    %6 = arith.addf %3, %5 : vector<128x128xf32>
    %cst_5 = arith.constant 0.000000e+00 : f32
    %7 = vector.broadcast %cst_5 : f32 to vector<128x128xf32>
    %8 = arith.maximumf %6, %7 : vector<128x128xf32>
    %c0_6 = arith.constant 0 : index
    %c0_7 = arith.constant 0 : index
    %9 = vector.load %arg4[%c0_6, %c0_7] : memref<128x128xbf16, #tpu.memory_space<vmem>>, vector<128x128xbf16>
    %10 = arith.truncf %8 : vector<128x128xf32> to vector<128x128xbf16>
    %cst_8 = arith.constant dense<0.000000e+00> : vector<128x128xf32>
    %11 = tpu.matmul %9, %10, %cst_8 {dimension_numbers = #tpu.dot_dimension_numbers<[1], [0], [0], [1], [0, 0, 1, 1], [], []>} : vector<128x128xbf16>, vector<128x128xbf16>, vector<128x128xf32> -> vector<128x128xf32>
    %c0_9 = arith.constant 0 : index
    %c0_10 = arith.constant 0 : index
    %12 = vector.load %arg5[%c0_9, %c0_10] : memref<128x1xf32, #tpu.memory_space<vmem>>, vector<128x1xf32>
    %13 = vector.broadcast %12 : vector<128x1xf32> to vector<128x128xf32>
    %14 = arith.addf %11, %13 : vector<128x128xf32>
    %cst_11 = arith.constant 0.000000e+00 : f32
    %15 = vector.broadcast %cst_11 : f32 to vector<128x128xf32>
    %16 = arith.maximumf %14, %15 : vector<128x128xf32>
    %c0_12 = arith.constant 0 : index
    %c0_13 = arith.constant 0 : index
    %17 = vector.load %arg6[%c0_12, %c0_13] : memref<128x1xf32, #tpu.memory_space<vmem>>, vector<128x1xf32>
    %18 = vector.broadcast %17 : vector<128x1xf32> to vector<128x128xf32>
    %19 = arith.mulf %16, %18 : vector<128x128xf32>
    %cst_14 = arith.constant dense<0.000000e+00> : vector<128xf32>
    %20 = vector.multi_reduction <add>, %19, %cst_14 [0] : vector<128x128xf32> to vector<128xf32>
    %21 = vector.shape_cast %20 : vector<128xf32> to vector<1x128xf32>
    %c0_15 = arith.constant 0 : index
    %c0_16 = arith.constant 0 : index
    %22 = vector.load %arg7[%c0_15, %c0_16] : memref<1x1xf32, #tpu.memory_space<vmem>>, vector<1x1xf32>
    %23 = vector.broadcast %22 : vector<1x1xf32> to vector<1x128xf32>
    %24 = arith.addf %21, %23 : vector<1x128xf32>
    %c0_17 = arith.constant 0 : index
    %c0_18 = arith.constant 0 : index
    %25 = vector.load %arg8[%c0_17, %c0_18] : memref<1x128xf32, #tpu.memory_space<vmem>>, vector<1x128xf32>
    tpu.vector_store %arg8[%c0_17, %c0_18], %24 {strides = array<i32>} : memref<1x128xf32, #tpu.memory_space<vmem>>, vector<1x128xf32>,
    return
  }
  func.func @transform_0(%arg0: i32) -> (i32, i32) {
    %c0_i32 = arith.constant 0 : i32
    %c0_i32_0 = arith.constant 0 : i32
    return %arg0, %c0_i32 : i32, i32
  }
  func.func @transform_1(%arg0: i32) -> (i32, i32) {
    %c0_i32 = arith.constant 0 : i32
    %c0_i32_0 = arith.constant 0 : i32
    %c0_i32_1 = arith.constant 0 : i32
    return %c0_i32, %c0_i32_0 : i32, i32
  }
  func.func @transform_2(%arg0: i32) -> (i32, i32) {
    %c0_i32 = arith.constant 0 : i32
    %c0_i32_0 = arith.constant 0 : i32
    %c0_i32_1 = arith.constant 0 : i32
    return %c0_i32, %c0_i32_0 : i32, i32
  }
  func.func @transform_3(%arg0: i32) -> (i32, i32) {
    %c0_i32 = arith.constant 0 : i32
    %c0_i32_0 = arith.constant 0 : i32
    %c0_i32_1 = arith.constant 0 : i32
    return %c0_i32, %c0_i32_0 : i32, i32
  }
  func.func @transform_4(%arg0: i32) -> (i32, i32) {
    %c0_i32 = arith.constant 0 : i32
    %c0_i32_0 = arith.constant 0 : i32
    %c0_i32_1 = arith.constant 0 : i32
    return %c0_i32, %c0_i32_0 : i32, i32
  }
  func.func @transform_5(%arg0: i32) -> (i32, i32) {
    %c0_i32 = arith.constant 0 : i32
    %c0_i32_0 = arith.constant 0 : i32
    %c0_i32_1 = arith.constant 0 : i32
    return %c0_i32, %c0_i32_0 : i32, i32
  }
  func.func @transform_6(%arg0: i32) -> (i32, i32) {
    %c0_i32 = arith.constant 0 : i32
    %c0_i32_0 = arith.constant 0 : i32
    %c0_i32_1 = arith.constant 0 : i32
    return %c0_i32, %c0_i32_0 : i32, i32
  }
  func.func @transform_7(%arg0: i32) -> (i32, i32) {
    %c0_i32 = arith.constant 0 : i32
    %c0_i32_0 = arith.constant 0 : i32
    return %c0_i32, %arg0 : i32, i32
  }
}

</mosaic_0001>

<llo_original>
// kernel: tpu_custom_call.1
$region0: #{tpu_custom_call.1}
  #allocation0 [shape = 'u32[]', space=smem, size = 0x4, offset = 0x4, fixed_abs, tag = 'smem constant byte address 0x4 - core index']
  #allocation1 [shape = 'u32[144,128]{1,0:T(1,128)}', space=vmem, size = 0x12000, scoped, tag = 'internal scratch']
  #allocation2 [shape = 'f32[1,1]{1,0:T(1,128)S(1)}', space=vmem, size = 0x200, scoped, tag = 'scoped memory for tpu_custom_call.1']
  %s0 = inlined_call_operand.vmem [shape: f32[128,16], index: 0, kind: input, shape index: {}]
  %s1 = inlined_call_operand.vmem [shape: bf16[128,16], index: 1, kind: input, shape index: {}]
  %s2 = inlined_call_operand.vmem [shape: f32[128,1], index: 2, kind: input, shape index: {}]
  %s3 = inlined_call_operand.vmem [shape: bf16[128,128], index: 3, kind: input, shape index: {}]
  %s4 = inlined_call_operand.vmem [shape: f32[128,1], index: 4, kind: input, shape index: {}]
  %s5 = inlined_call_operand.vmem [shape: f32[128,1], index: 5, kind: input, shape index: {}]
  %s6 = inlined_call_operand.<no memory space> [shape: f32[1,1], index: 6, kind: input, shape index: {}]
  %s7 = inlined_call_operand.hbm [shape: f32[1,128], index: 7, kind: output, shape index: {}]
  %s8 = sld [smem:[#allocation0]]
  $region38: #{tpu_custom_call.1} parent=0
    _
  %s10 = ssub.s32 1, %s8
  %s11 = scalar_select 0, %s10, %s8
  %v12 = vstv %s6
  %13 = vst [vmem:[#allocation2] sm:$0x1] %v12
  $region1: #{tpu_custom_call.1} parent=0
    #allocation3 [shape = 'u8[512]{0}', space=vmem, size = 0x400, scoped, tag = 'output window, operand 0, single buffered']
    #allocation4 [shape = 's32[1]{0}', space=sflag, size = 0x4, scoped, tag = 'scoped memory for tpu_custom_call.1']
    %14 = vsyncpa [#allocation4], 0
    // Predicated region
    $region2: #{tpu_custom_call.1} parent=1 // pred_check
      _
    $region3: #{tpu_custom_call.1} parent=1 // pred_check_branch
      %16 = sbr.rel (0) target = $region5
    $region4: #{tpu_custom_call.1} parent=1 // pred_region
      _
    $region5: #{tpu_custom_call.1} parent=1 // pred_fallthru
      _
    // Predicated region
    $region6: #{tpu_custom_call.1} parent=1 // pred_check
      _
    $region7: #{tpu_custom_call.1} parent=1 // pred_check_branch
      %18 = sbr.rel (0) target = $region9
    $region8: #{tpu_custom_call.1} parent=1 // pred_region
      _
    $region9: #{tpu_custom_call.1} parent=1 // pred_fallthru
      _
    // Predicated region
    $region10: #{tpu_custom_call.1} parent=1 // pred_check
      _
    $region11: #{tpu_custom_call.1} parent=1 // pred_check_branch
      %20 = sbr.rel (0) target = $region13
    $region12: #{tpu_custom_call.1} parent=1 // pred_region
      _
    $region13: #{tpu_custom_call.1} parent=1 // pred_fallthru
      _
    // Predicated region
    $region14: #{tpu_custom_call.1} parent=1 // pred_check
      _
    $region15: #{tpu_custom_call.1} parent=1 // pred_check_branch
      %22 = sbr.rel (0) target = $region17
    $region16: #{tpu_custom_call.1} parent=1 // pred_region
      _
    $region17: #{tpu_custom_call.1} parent=1 // pred_fallthru
      _
    // Predicated region
    $region18: #{tpu_custom_call.1} parent=1 // pred_check
      _
    $region19: #{tpu_custom_call.1} parent=1 // pred_check_branch
      %24 = sbr.rel (0) target = $region21
    $region20: #{tpu_custom_call.1} parent=1 // pred_region
      _
    $region21: #{tpu_custom_call.1} parent=1 // pred_fallthru
      _
    // Predicated region
    $region22: #{tpu_custom_call.1} parent=1 // pred_check
      _
    $region23: #{tpu_custom_call.1} parent=1 // pred_check_branch
      %26 = sbr.rel (0) target = $region25
    $region24: #{tpu_custom_call.1} parent=1 // pred_region
      _
    $region25: #{tpu_custom_call.1} parent=1 // pred_fallthru
      _
    // Predicated region
    $region26: #{tpu_custom_call.1} parent=1 // pred_check
      _
    $region27: #{tpu_custom_call.1} parent=1 // pred_check_branch
      %28 = sbr.rel (0) target = $region29
    $region28: #{tpu_custom_call.1} parent=1 // pred_region
      _
    $region29: #{tpu_custom_call.1} parent=1 // pred_fallthru
      _
    %v30 = vld [vmem:[%s0] sm:$0xff]
    %v31 = vld [vmem:[%s0 + $0x8] sm:$0xff]
    %v32 = vld [vmem:[%s0 + $0x10] sm:$0xff]
    %v33 = vld [vmem:[%s0 + $0x18] sm:$0xff]
    %v34 = vld [vmem:[%s0 + $0x20] sm:$0xff]
    %v35 = vld [vmem:[%s0 + $0x28] sm:$0xff]
    %v36 = vld [vmem:[%s0 + $0x30] sm:$0xff]
    %v37 = vld [vmem:[%s0 + $0x38] sm:$0xff]
    %v38 = vld [vmem:[%s0 + $0x40] sm:$0xff]
    %v39 = vld [vmem:[%s0 + $0x48] sm:$0xff]
    %v40 = vld [vmem:[%s0 + $0x50] sm:$0xff]
    %v41 = vld [vmem:[%s0 + $0x58] sm:$0xff]
    %v42 = vld [vmem:[%s0 + $0x60] sm:$0xff]
    %v43 = vld [vmem:[%s0 + $0x68] sm:$0xff]
    %v44 = vld [vmem:[%s0 + $0x70] sm:$0xff]
    %v45 = vld [vmem:[%s0 + $0x78] sm:$0xff]
    %v46 = vpack.c.bf16 %v31, %v30
    %v47 = vpack.c.bf16 %v33, %v32
    %v48 = vpack.c.bf16 %v35, %v34
    %v49 = vpack.c.bf16 %v37, %v36
    %v50 = vpack.c.bf16 %v39, %v38
    %v51 = vpack.c.bf16 %v41, %v40
    %v52 = vpack.c.bf16 %v43, %v42
    %v53 = vpack.c.bf16 %v45, %v44
    %v54 = vld [vmem:[%s1] sm:$0xf]
    %v55 = vld [vmem:[%s1 + $0x4] sm:$0xf]
    %v56 = vld [vmem:[%s1 + $0x8] sm:$0xf]
    %v57 = vld [vmem:[%s1 + $0xc] sm:$0xf]
    %v58 = vld [vmem:[%s1 + $0x10] sm:$0xf]
    %v59 = vld [vmem:[%s1 + $0x14] sm:$0xf]
    %v60 = vld [vmem:[%s1 + $0x18] sm:$0xf]
    %v61 = vld [vmem:[%s1 + $0x1c] sm:$0xf]
    %v62 = vld [vmem:[%s1 + $0x20] sm:$0xf]
    %v63 = vld [vmem:[%s1 + $0x24] sm:$0xf]
    %v64 = vld [vmem:[%s1 + $0x28] sm:$0xf]
    %v65 = vld [vmem:[%s1 + $0x2c] sm:$0xf]
    %v66 = vld [vmem:[%s1 + $0x30] sm:$0xf]
    %v67 = vld [vmem:[%s1 + $0x34] sm:$0xf]
    %v68 = vld [vmem:[%s1 + $0x38] sm:$0xf]
    %v69 = vld [vmem:[%s1 + $0x3c] sm:$0xf]
    %v70 = vld [vmem:[%s2] sm:$0xff]
    %v71 = vld [vmem:[%s2 + $0x8] sm:$0xff]
    %v72 = vld [vmem:[%s2 + $0x10] sm:$0xff]
    %v73 = vld [vmem:[%s2 + $0x18] sm:$0xff]
    %v74 = vld [vmem:[%s2 + $0x20] sm:$0xff]
    %v75 = vld [vmem:[%s2 + $0x28] sm:$0xff]
    %v76 = vld [vmem:[%s2 + $0x30] sm:$0xff]
    %v77 = vld [vmem:[%s2 + $0x38] sm:$0xff]
    %v78 = vld [vmem:[%s2 + $0x40] sm:$0xff]
    %v79 = vld [vmem:[%s2 + $0x48] sm:$0xff]
    %v80 = vld [vmem:[%s2 + $0x50] sm:$0xff]
    %v81 = vld [vmem:[%s2 + $0x58] sm:$0xff]
    %v82 = vld [vmem:[%s2 + $0x60] sm:$0xff]
    %v83 = vld [vmem:[%s2 + $0x68] sm:$0xff]
    %v84 = vld [vmem:[%s2 + $0x70] sm:$0xff]
    %v85 = vld [vmem:[%s2 + $0x78] sm:$0xff]
    %87 = vset.pattern.permute.xlu0 0
    %88 = vperm.xlu0 %87, %v70
    %v89 = vpop.permute.xlu0 %88
    %92 = vset.pattern.permute.xlu0 0
    %93 = vperm.xlu0 %92, %v71
    %v94 = vpop.permute.xlu0 %93
    %97 = vset.pattern.permute.xlu0 0
    %98 = vperm.xlu0 %97, %v72
    %v99 = vpop.permute.xlu0 %98
    %102 = vset.pattern.permute.xlu0 0
    %103 = vperm.xlu0 %102, %v73
    %v104 = vpop.permute.xlu0 %103
    %107 = vset.pattern.permute.xlu0 0
    %108 = vperm.xlu0 %107, %v74
    %v109 = vpop.permute.xlu0 %108
    %112 = vset.pattern.permute.xlu0 0
    %113 = vperm.xlu0 %112, %v75
    %v114 = vpop.permute.xlu0 %113
    %117 = vset.pattern.permute.xlu0 0
    %118 = vperm.xlu0 %117, %v76
    %v119 = vpop.permute.xlu0 %118
    %122 = vset.pattern.permute.xlu0 0
    %123 = vperm.xlu0 %122, %v77
    %v124 = vpop.permute.xlu0 %123
    %127 = vset.pattern.permute.xlu0 0
    %128 = vperm.xlu0 %127, %v78
    %v129 = vpop.permute.xlu0 %128
    %132 = vset.pattern.permute.xlu0 0
    %133 = vperm.xlu0 %132, %v79
    %v134 = vpop.permute.xlu0 %133
    %137 = vset.pattern.permute.xlu0 0
    %138 = vperm.xlu0 %137, %v80
    %v139 = vpop.permute.xlu0 %138
    %142 = vset.pattern.permute.xlu0 0
    %143 = vperm.xlu0 %142, %v81
    %v144 = vpop.permute.xlu0 %143
    %147 = vset.pattern.permute.xlu0 0
    %148 = vperm.xlu0 %147, %v82
    %v149 = vpop.permute.xlu0 %148
    %152 = vset.pattern.permute.xlu0 0
    %153 = vperm.xlu0 %152, %v83
    %v154 = vpop.permute.xlu0 %153
    %157 = vset.pattern.permute.xlu0 0
    %158 = vperm.xlu0 %157, %v84
    %v159 = vpop.permute.xlu0 %158
    %162 = vset.pattern.permute.xlu0 0
    %163 = vperm.xlu0 %162, %v85
    %v164 = vpop.permute.xlu0 %163
    %v182 = vunpack.c.l.b16 %v54
    %v183 = vunpack.c.l.b16 %v55
    %v184 = vunpack.c.l.b16 %v56
    %v185 = vunpack.c.l.b16 %v57
    %v186 = vunpack.c.l.b16 %v58
    %v187 = vunpack.c.l.b16 %v59
    %v188 = vunpack.c.l.b16 %v60
    %v189 = vunpack.c.l.b16 %v61
    %v190 = vunpack.c.l.b16 %v62
    %v191 = vunpack.c.l.b16 %v63
    %v192 = vunpack.c.l.b16 %v64
    %v193 = vunpack.c.l.b16 %v65
    %v194 = vunpack.c.l.b16 %v66
    %v195 = vunpack.c.l.b16 %v67
    %v196 = vunpack.c.l.b16 %v68
    %v197 = vunpack.c.l.b16 %v69
    %v198 = vpack.c.b16 %v183, %v182
    %v199 = vpack.c.b16 %v185, %v184
    %v200 = vpack.c.b16 %v187, %v186
    %v201 = vpack.c.b16 %v189, %v188
    %v202 = vpack.c.b16 %v191, %v190
    %v203 = vpack.c.b16 %v193, %v192
    %v204 = vpack.c.b16 %v195, %v194
    %v205 = vpack.c.b16 %v197, %v196
    %vm206 = vcmask 130048
    %v208 = vsel %vm206, %v198, 0
    %v211 = vsel %vm206, %v199, 0
    %v214 = vsel %vm206, %v200, 0
    %v217 = vsel %vm206, %v201, 0
    %v220 = vsel %vm206, %v202, 0
    %v223 = vsel %vm206, %v203, 0
    %v226 = vsel %vm206, %v204, 0
    %v229 = vsel %vm206, %v205, 0
    %v232 = vsel %vm206, %v46, 0
    %v235 = vsel %vm206, %v47, 0
    %v238 = vsel %vm206, %v48, 0
    %v241 = vsel %vm206, %v49, 0
    %v244 = vsel %vm206, %v50, 0
    %v247 = vsel %vm206, %v51, 0
    %v250 = vsel %vm206, %v52, 0
    %v253 = vsel %vm206, %v53, 0
    %255 = vmatprep.subr.bf16.mxu0 0
    %256 = vmatpush1.bf16.xpose.msra.mxu0 %v232
    %257 = vmatprep.subr.bf16.mxu0 0
    %258 = vmatpush1.bf16.xpose.msra.mxu0 %v235
    %259 = vmatprep.subr.bf16.mxu0 0
    %260 = vmatpush1.bf16.xpose.msra.mxu0 %v238
    %261 = vmatprep.subr.bf16.mxu0 0
    %262 = vmatpush1.bf16.xpose.msra.mxu0 %v241
    %263 = vmatprep.subr.bf16.mxu0 0
    %264 = vmatpush1.bf16.xpose.msra.mxu0 %v244
    %265 = vmatprep.subr.bf16.mxu0 0
    %266 = vmatpush1.bf16.xpose.msra.mxu0 %v247
    %267 = vmatprep.subr.bf16.mxu0 0
    %268 = vmatpush1.bf16.xpose.msra.mxu0 %v250
    %269 = vmatprep.subr.bf16.mxu0 0
    %270 = vmatpush1.bf16.xpose.msra.mxu0 %v253
    %271 = vmatprep.subr.bf16.mxu0 0
    %272 = vmatpush1.bf16.xpose.msra.mxu0 0
    %273 = vmatprep.subr.bf16.mxu0 0
    %274 = vmatpush1.bf16.xpose.msra.mxu0 0
    %275 = vmatprep.subr.bf16.mxu0 0
    %276 = vmatpush1.bf16.xpose.msra.mxu0 0
    %277 = vmatprep.subr.bf16.mxu0 0
    %278 = vmatpush1.bf16.xpose.msra.mxu0 0
    %279 = vmatprep.subr.bf16.mxu0 0
    %280 = vmatpush1.bf16.xpose.msra.mxu0 0
    %281 = vmatprep.subr.bf16.mxu0 0
    %282 = vmatpush1.bf16.xpose.msra.mxu0 0
    %283 = vmatprep.subr.bf16.mxu0 0
    %284 = vmatpush1.bf16.xpose.msra.mxu0 0
    %285 = vmatprep.subr.bf16.mxu0 0
    %286 = vmatpush1.bf16.xpose.msra.mxu0 0
    %287 = vmatprep.mubr.bf16.mxu0 0
    %288 = vmatmul.mubr.bf16.gmra.mrb[0].mxu0 %v208
    %v289 = vpop.f32.mrb[0].mxu0
    %v290 = vadd.f32 %v89, %v289
    %v291 = vpop.f32.mrb[0].mxu0
    %v292 = vpop.f32.mrb[0].mxu0
    %v293 = vadd.f32 %v94, %v292
    %v294 = vpop.f32.mrb[0].mxu0
    %295 = vmatprep.mubr.bf16.mxu0 0
    %296 = vmatmul.mubr.bf16.gmra.mrb[0].mxu0 %v211
    %v297 = vpop.f32.mrb[0].mxu0
    %v298 = vadd.f32 %v99, %v297
    %v299 = vpop.f32.mrb[0].mxu0
    %v300 = vpop.f32.mrb[0].mxu0
    %v301 = vadd.f32 %v104, %v300
    %v302 = vpop.f32.mrb[0].mxu0
    %303 = vmatprep.mubr.bf16.mxu0 0
    %304 = vmatmul.mubr.bf16.gmra.mrb[0].mxu0 %v214
    %v305 = vpop.f32.mrb[0].mxu0
    %v306 = vadd.f32 %v109, %v305
    %v307 = vpop.f32.mrb[0].mxu0
    %v308 = vpop.f32.mrb[0].mxu0
    %v309 = vadd.f32 %v114, %v308
    %v310 = vpop.f32.mrb[0].mxu0
    %311 = vmatprep.mubr.bf16.mxu0 0
    %312 = vmatmul.mubr.bf16.gmra.mrb[0].mxu0 %v217
    %v313 = vpop.f32.mrb[0].mxu0
    %v314 = vadd.f32 %v119, %v313
    %v315 = vpop.f32.mrb[0].mxu0
    %v316 = vpop.f32.mrb[0].mxu0
    %v317 = vadd.f32 %v124, %v316
    %v318 = vpop.f32.mrb[0].mxu0
    %319 = vmatprep.mubr.bf16.mxu0 0
    %320 = vmatmul.mubr.bf16.gmra.mrb[0].mxu0 %v220
    %v321 = vpop.f32.mrb[0].mxu0
    %v322 = vadd.f32 %v129, %v321
    %v323 = vpop.f32.mrb[0].mxu0
    %v324 = vpop.f32.mrb[0].mxu0
    %v325 = vadd.f32 %v134, %v324
    %v326 = vpop.f32.mrb[0].mxu0
    %327 = vmatprep.mubr.bf16.mxu0 0
    %328 = vmatmul.mubr.bf16.gmra.mrb[0].mxu0 %v223
    %v329 = vpop.f32.mrb[0].mxu0
    %v330 = vadd.f32 %v139, %v329
    %v331 = vpop.f32.mrb[0].mxu0
    %v332 = vpop.f32.mrb[0].mxu0
    %v333 = vadd.f32 %v144, %v332
    %v334 = vpop.f32.mrb[0].mxu0
    %335 = vmatprep.mubr.bf16.mxu0 0
    %336 = vmatmul.mubr.bf16.gmra.mrb[0].mxu0 %v226
    %v337 = vpop.f32.mrb[0].mxu0
    %v338 = vadd.f32 %v149, %v337
    %v339 = vpop.f32.mrb[0].mxu0
    %v340 = vpop.f32.mrb[0].mxu0
    %v341 = vadd.f32 %v154, %v340
    %v342 = vpop.f32.mrb[0].mxu0
    %343 = vmatprep.mubr.bf16.mxu0 0
    %344 = vmatmul.mubr.bf16.gmra.mrb[0].mxu0 %v229
    %v345 = vpop.f32.mrb[0].mxu0
    %v346 = vadd.f32 %v159, %v345
    %v347 = vpop.f32.mrb[0].mxu0
    %v348 = vpop.f32.mrb[0].mxu0
    %v349 = vadd.f32 %v164, %v348
    %v350 = vpop.f32.mrb[0].mxu0
    %351 = vdwg.mxu0
    %v352 = vmax.f32 %v290, 0.0
    %v353 = vmax.f32 %v293, 0.0
    %v354 = vmax.f32 %v298, 0.0
    %v355 = vmax.f32 %v301, 0.0
    %v356 = vmax.f32 %v306, 0.0
    %v357 = vmax.f32 %v309, 0.0
    %v358 = vmax.f32 %v314, 0.0
    %v359 = vmax.f32 %v317, 0.0
    %v360 = vmax.f32 %v322, 0.0
    %v361 = vmax.f32 %v325, 0.0
    %v362 = vmax.f32 %v330, 0.0
    %v363 = vmax.f32 %v333, 0.0
    %v364 = vmax.f32 %v338, 0.0
    %v365 = vmax.f32 %v341, 0.0
    %v366 = vmax.f32 %v346, 0.0
    %v367 = vmax.f32 %v349, 0.0
    %v368 = vld [vmem:[%s3] sm:$0xf]
    %v369 = vld [vmem:[%s3 + $0x4] sm:$0xf]
    %v370 = vld [vmem:[%s3 + $0x8] sm:$0xf]
    %v371 = vld [vmem:[%s3 + $0xc] sm:$0xf]
    %v372 = vld [vmem:[%s3 + $0x10] sm:$0xf]
    %v373 = vld [vmem:[%s3 + $0x14] sm:$0xf]
    %v374 = vld [vmem:[%s3 + $0x18] sm:$0xf]
    %v375 = vld [vmem:[%s3 + $0x1c] sm:$0xf]
    %v376 = vld [vmem:[%s3 + $0x20] sm:$0xf]
    %v377 = vld [vmem:[%s3 + $0x24] sm:$0xf]
    %v378 = vld [vmem:[%s3 + $0x28] sm:$0xf]
    %v379 = vld [vmem:[%s3 + $0x2c] sm:$0xf]
    %v380 = vld [vmem:[%s3 + $0x30] sm:$0xf]
    %v381 = vld [vmem:[%s3 + $0x34] sm:$0xf]
    %v382 = vld [vmem:[%s3 + $0x38] sm:$0xf]
    %v383 = vld [vmem:[%s3 + $0x3c] sm:$0xf]
    %v384 = vpack.c.bf16 %v353, %v352
    %v385 = vpack.c.bf16 %v355, %v354
    %v386 = vpack.c.bf16 %v357, %v356
    %v387 = vpack.c.bf16 %v359, %v358
    %v388 = vpack.c.bf16 %v361, %v360
    %v389 = vpack.c.bf16 %v363, %v362
    %v390 = vpack.c.bf16 %v365, %v364
    %v391 = vpack.c.bf16 %v367, %v366
    %v392 = vld [vmem:[%s4] sm:$0xff]
    %v393 = vld [vmem:[%s4 + $0x8] sm:$0xff]
    %v394 = vld [vmem:[%s4 + $0x10] sm:$0xff]
    %v395 = vld [vmem:[%s4 + $0x18] sm:$0xff]
    %v396 = vld [vmem:[%s4 + $0x20] sm:$0xff]
    %v397 = vld [vmem:[%s4 + $0x28] sm:$0xff]
    %v398 = vld [vmem:[%s4 + $0x30] sm:$0xff]
    %v399 = vld [vmem:[%s4 + $0x38] sm:$0xff]
    %v400 = vld [vmem:[%s4 + $0x40] sm:$0xff]
    %v401 = vld [vmem:[%s4 + $0x48] sm:$0xff]
    %v402 = vld [vmem:[%s4 + $0x50] sm:$0xff]
    %v403 = vld [vmem:[%s4 + $0x58] sm:$0xff]
    %v404 = vld [vmem:[%s4 + $0x60] sm:$0xff]
    %v405 = vld [vmem:[%s4 + $0x68] sm:$0xff]
    %v406 = vld [vmem:[%s4 + $0x70] sm:$0xff]
    %v407 = vld [vmem:[%s4 + $0x78] sm:$0xff]
    %409 = vset.pattern.permute.xlu0 0
    %410 = vperm.xlu0 %409, %v392
    %v411 = vpop.permute.xlu0 %410
    %414 = vset.pattern.permute.xlu0 0
    %415 = vperm.xlu0 %414, %v393
    %v416 = vpop.permute.xlu0 %415
    %419 = vset.pattern.permute.xlu0 0
    %420 = vperm.xlu0 %419, %v394
    %v421 = vpop.permute.xlu0 %420
    %424 = vset.pattern.permute.xlu0 0
    %425 = vperm.xlu0 %424, %v395
    %v426 = vpop.permute.xlu0 %425
    %429 = vset.pattern.permute.xlu0 0
    %430 = vperm.xlu0 %429, %v396
    %v431 = vpop.permute.xlu0 %430
    %434 = vset.pattern.permute.xlu0 0
    %435 = vperm.xlu0 %434, %v397
    %v436 = vpop.permute.xlu0 %435
    %439 = vset.pattern.permute.xlu0 0
    %440 = vperm.xlu0 %439, %v398
    %v441 = vpop.permute.xlu0 %440
    %444 = vset.pattern.permute.xlu0 0
    %445 = vperm.xlu0 %444, %v399
    %v446 = vpop.permute.xlu0 %445
    %449 = vset.pattern.permute.xlu0 0
    %450 = vperm.xlu0 %449, %v400
    %v451 = vpop.permute.xlu0 %450
    %454 = vset.pattern.permute.xlu0 0
    %455 = vperm.xlu0 %454, %v401
    %v456 = vpop.permute.xlu0 %455
    %459 = vset.pattern.permute.xlu0 0
    %460 = vperm.xlu0 %459, %v402
    %v461 = vpop.permute.xlu0 %460
    %464 = vset.pattern.permute.xlu0 0
    %465 = vperm.xlu0 %464, %v403
    %v466 = vpop.permute.xlu0 %465
    %469 = vset.pattern.permute.xlu0 0
    %470 = vperm.xlu0 %469, %v404
    %v471 = vpop.permute.xlu0 %470
    %474 = vset.pattern.permute.xlu0 0
    %475 = vperm.xlu0 %474, %v405
    %v476 = vpop.permute.xlu0 %475
    %479 = vset.pattern.permute.xlu0 0
    %480 = vperm.xlu0 %479, %v406
    %v481 = vpop.permute.xlu0 %480
    %484 = vset.pattern.permute.xlu0 0
    %485 = vperm.xlu0 %484, %v407
    %v486 = vpop.permute.xlu0 %485
    %v504 = vunpack.c.l.b16 %v368
    %v505 = vunpack.c.l.b16 %v369
    %v506 = vunpack.c.l.b16 %v370
    %v507 = vunpack.c.l.b16 %v371
    %v508 = vunpack.c.l.b16 %v372
    %v509 = vunpack.c.l.b16 %v373
    %v510 = vunpack.c.l.b16 %v374
    %v511 = vunpack.c.l.b16 %v375
    %v512 = vunpack.c.l.b16 %v376
    %v513 = vunpack.c.l.b16 %v377
    %v514 = vunpack.c.l.b16 %v378
    %v515 = vunpack.c.l.b16 %v379
    %v516 = vunpack.c.l.b16 %v380
    %v517 = vunpack.c.l.b16 %v381
    %v518 = vunpack.c.l.b16 %v382
    %v519 = vunpack.c.l.b16 %v383
    %v520 = vpack.c.b16 %v505, %v504
    %v521 = vpack.c.b16 %v507, %v506
    %v522 = vpack.c.b16 %v509, %v508
    %v523 = vpack.c.b16 %v511, %v510
    %v524 = vpack.c.b16 %v513, %v512
    %v525 = vpack.c.b16 %v515, %v514
    %v526 = vpack.c.b16 %v517, %v516
    %v527 = vpack.c.b16 %v519, %v518
    %536 = vmatprep.subr.bf16.mxu0 0
    %537 = vmatpush1.bf16.msra.mxu0 %v384
    %538 = vmatprep.subr.bf16.mxu0 0
    %539 = vmatpush1.bf16.msra.mxu0 %v385
    %540 = vmatprep.subr.bf16.mxu0 0
    %541 = vmatpush1.bf16.msra.mxu0 %v386
    %542 = vmatprep.subr.bf16.mxu0 0
    %543 = vmatpush1.bf16.msra.mxu0 %v387
    %544 = vmatprep.subr.bf16.mxu0 0
    %545 = vmatpush1.bf16.msra.mxu0 %v388
    %546 = vmatprep.subr.bf16.mxu0 0
    %547 = vmatpush1.bf16.msra.mxu0 %v389
    %548 = vmatprep.subr.bf16.mxu0 0
    %549 = vmatpush1.bf16.msra.mxu0 %v390
    %550 = vmatprep.subr.bf16.mxu0 0
    %551 = vmatpush1.bf16.msra.mxu0 %v391
    %552 = vmatprep.subr.bf16.mxu0 0
    %553 = vmatpush1.bf16.msra.mxu0 0
    %554 = vmatprep.subr.bf16.mxu0 0
    %555 = vmatpush1.bf16.msra.mxu0 0
    %556 = vmatprep.subr.bf16.mxu0 0
    %557 = vmatpush1.bf16.msra.mxu0 0
    %558 = vmatprep.subr.bf16.mxu0 0
    %559 = vmatpush1.bf16.msra.mxu0 0
    %560 = vmatprep.subr.bf16.mxu0 0
    %561 = vmatpush1.bf16.msra.mxu0 0
    %562 = vmatprep.subr.bf16.mxu0 0
    %563 = vmatpush1.bf16.msra.mxu0 0
    %564 = vmatprep.subr.bf16.mxu0 0
    %565 = vmatpush1.bf16.msra.mxu0 0
    %566 = vmatprep.subr.bf16.mxu0 0
    %567 = vmatpush1.bf16.msra.mxu0 0
    %568 = vmatprep.mubr.bf16.mxu0 0
    %569 = vmatmul.mubr.bf16.gmra.mrb[0].mxu0 %v520
    %v570 = vpop.f32.mrb[0].mxu0
    %v571 = vadd.f32 %v411, %v570
    %v572 = vpop.f32.mrb[0].mxu0
    %v573 = vpop.f32.mrb[0].mxu0
    %v574 = vadd.f32 %v416, %v573
    %v575 = vpop.f32.mrb[0].mxu0
    %576 = vmatprep.mubr.bf16.mxu0 0
    %577 = vmatmul.mubr.bf16.gmra.mrb[0].mxu0 %v521
    %v578 = vpop.f32.mrb[0].mxu0
    %v579 = vadd.f32 %v421, %v578
    %v580 = vpop.f32.mrb[0].mxu0
    %v581 = vpop.f32.mrb[0].mxu0
    %v582 = vadd.f32 %v426, %v581
    %v583 = vpop.f32.mrb[0].mxu0
    %584 = vmatprep.mubr.bf16.mxu0 0
    %585 = vmatmul.mubr.bf16.gmra.mrb[0].mxu0 %v522
    %v586 = vpop.f32.mrb[0].mxu0
    %v587 = vadd.f32 %v431, %v586
    %v588 = vpop.f32.mrb[0].mxu0
    %v589 = vpop.f32.mrb[0].mxu0
    %v590 = vadd.f32 %v436, %v589
    %v591 = vpop.f32.mrb[0].mxu0
    %592 = vmatprep.mubr.bf16.mxu0 0
    %593 = vmatmul.mubr.bf16.gmra.mrb[0].mxu0 %v523
    %v594 = vpop.f32.mrb[0].mxu0
    %v595 = vadd.f32 %v441, %v594
    %v596 = vpop.f32.mrb[0].mxu0
    %v597 = vpop.f32.mrb[0].mxu0
    %v598 = vadd.f32 %v446, %v597
    %v599 = vpop.f32.mrb[0].mxu0
    %600 = vmatprep.mubr.bf16.mxu0 0
    %601 = vmatmul.mubr.bf16.gmra.mrb[0].mxu0 %v524
    %v602 = vpop.f32.mrb[0].mxu0
    %v603 = vadd.f32 %v451, %v602
    %v604 = vpop.f32.mrb[0].mxu0
    %v605 = vpop.f32.mrb[0].mxu0
    %v606 = vadd.f32 %v456, %v605
    %v607 = vpop.f32.mrb[0].mxu0
    %608 = vmatprep.mubr.bf16.mxu0 0
    %609 = vmatmul.mubr.bf16.gmra.mrb[0].mxu0 %v525
    %v610 = vpop.f32.mrb[0].mxu0
    %v611 = vadd.f32 %v461, %v610
    %v612 = vpop.f32.mrb[0].mxu0
    %v613 = vpop.f32.mrb[0].mxu0
    %v614 = vadd.f32 %v466, %v613
    %v615 = vpop.f32.mrb[0].mxu0
    %616 = vmatprep.mubr.bf16.mxu0 0
    %617 = vmatmul.mubr.bf16.gmra.mrb[0].mxu0 %v526
    %v618 = vpop.f32.mrb[0].mxu0
    %v619 = vadd.f32 %v471, %v618
    %v620 = vpop.f32.mrb[0].mxu0
    %v621 = vpop.f32.mrb[0].mxu0
    %v622 = vadd.f32 %v476, %v621
    %v623 = vpop.f32.mrb[0].mxu0
    %624 = vmatprep.mubr.bf16.mxu0 0
    %625 = vmatmul.mubr.bf16.gmra.mrb[0].mxu0 %v527
    %v626 = vpop.f32.mrb[0].mxu0
    %v627 = vadd.f32 %v481, %v626
    %v628 = vpop.f32.mrb[0].mxu0
    %v629 = vpop.f32.mrb[0].mxu0
    %v630 = vadd.f32 %v486, %v629
    %v631 = vpop.f32.mrb[0].mxu0
    %632 = vdwg.mxu0
    %v633 = vmax.f32 %v571, 0.0
    %v634 = vmax.f32 %v574, 0.0
    %v635 = vmax.f32 %v579, 0.0
    %v636 = vmax.f32 %v582, 0.0
    %v637 = vmax.f32 %v587, 0.0
    %v638 = vmax.f32 %v590, 0.0
    %v639 = vmax.f32 %v595, 0.0
    %v640 = vmax.f32 %v598, 0.0
    %v641 = vmax.f32 %v603, 0.0
    %v642 = vmax.f32 %v606, 0.0
    %v643 = vmax.f32 %v611, 0.0
    %v644 = vmax.f32 %v614, 0.0
    %v645 = vmax.f32 %v619, 0.0
    %v646 = vmax.f32 %v622, 0.0
    %v647 = vmax.f32 %v627, 0.0
    %v648 = vmax.f32 %v630, 0.0
    %v649 = vld [vmem:[%s5] sm:$0xff]
    %v650 = vld [vmem:[%s5 + $0x8] sm:$0xff]
    %v651 = vld [vmem:[%s5 + $0x10] sm:$0xff]
    %v652 = vld [vmem:[%s5 + $0x18] sm:$0xff]
    %v653 = vld [vmem:[%s5 + $0x20] sm:$0xff]
    %v654 = vld [vmem:[%s5 + $0x28] sm:$0xff]
    %v655 = vld [vmem:[%s5 + $0x30] sm:$0xff]
    %v656 = vld [vmem:[%s5 + $0x38] sm:$0xff]
    %v657 = vld [vmem:[%s5 + $0x40] sm:$0xff]
    %v658 = vld [vmem:[%s5 + $0x48] sm:$0xff]
    %v659 = vld [vmem:[%s5 + $0x50] sm:$0xff]
    %v660 = vld [vmem:[%s5 + $0x58] sm:$0xff]
    %v661 = vld [vmem:[%s5 + $0x60] sm:$0xff]
    %v662 = vld [vmem:[%s5 + $0x68] sm:$0xff]
    %v663 = vld [vmem:[%s5 + $0x70] sm:$0xff]
    %v664 = vld [vmem:[%s5 + $0x78] sm:$0xff]
    %666 = vset.pattern.permute.xlu0 0
    %667 = vperm.xlu0 %666, %v649
    %v668 = vpop.permute.xlu0 %667
    %671 = vset.pattern.permute.xlu0 0
    %672 = vperm.xlu0 %671, %v650
    %v673 = vpop.permute.xlu0 %672
    %676 = vset.pattern.permute.xlu0 0
    %677 = vperm.xlu0 %676, %v651
    %v678 = vpop.permute.xlu0 %677
    %681 = vset.pattern.permute.xlu0 0
    %682 = vperm.xlu0 %681, %v652
    %v683 = vpop.permute.xlu0 %682
    %686 = vset.pattern.permute.xlu0 0
    %687 = vperm.xlu0 %686, %v653
    %v688 = vpop.permute.xlu0 %687
    %691 = vset.pattern.permute.xlu0 0
    %692 = vperm.xlu0 %691, %v654
    %v693 = vpop.permute.xlu0 %692
    %696 = vset.pattern.permute.xlu0 0
    %697 = vperm.xlu0 %696, %v655
    %v698 = vpop.permute.xlu0 %697
    %701 = vset.pattern.permute.xlu0 0
    %702 = vperm.xlu0 %701, %v656
    %v703 = vpop.permute.xlu0 %702
    %706 = vset.pattern.permute.xlu0 0
    %707 = vperm.xlu0 %706, %v657
    %v708 = vpop.permute.xlu0 %707
    %711 = vset.pattern.permute.xlu0 0
    %712 = vperm.xlu0 %711, %v658
    %v713 = vpop.permute.xlu0 %712
    %716 = vset.pattern.permute.xlu0 0
    %717 = vperm.xlu0 %716, %v659
    %v718 = vpop.permute.xlu0 %717
    %721 = vset.pattern.permute.xlu0 0
    %722 = vperm.xlu0 %721, %v660
    %v723 = vpop.permute.xlu0 %722
    %726 = vset.pattern.permute.xlu0 0
    %727 = vperm.xlu0 %726, %v661
    %v728 = vpop.permute.xlu0 %727
    %731 = vset.pattern.permute.xlu0 0
    %732 = vperm.xlu0 %731, %v662
    %v733 = vpop.permute.xlu0 %732
    %736 = vset.pattern.permute.xlu0 0
    %737 = vperm.xlu0 %736, %v663
    %v738 = vpop.permute.xlu0 %737
    %741 = vset.pattern.permute.xlu0 0
    %742 = vperm.xlu0 %741, %v664
    %v743 = vpop.permute.xlu0 %742
    %v745 = vmul.f32 %v633, %v668
    %v746 = vmul.f32 %v634, %v673
    %v747 = vmul.f32 %v635, %v678
    %v748 = vmul.f32 %v636, %v683
    %v749 = vmul.f32 %v637, %v688
    %v750 = vmul.f32 %v638, %v693
    %v751 = vmul.f32 %v639, %v698
    %v752 = vmul.f32 %v640, %v703
    %v753 = vmul.f32 %v641, %v708
    %v754 = vmul.f32 %v642, %v713
    %v755 = vmul.f32 %v643, %v718
    %v756 = vmul.f32 %v644, %v723
    %v757 = vmul.f32 %v645, %v728
    %v758 = vmul.f32 %v646, %v733
    %v759 = vmul.f32 %v647, %v738
    %v760 = vmul.f32 %v648, %v743
    %v761 = vadd.f32 %v745, %v746
    %v762 = vadd.f32 %v761, %v747
    %v763 = vadd.f32 %v762, %v748
    %v764 = vadd.f32 %v763, %v749
    %v765 = vadd.f32 %v764, %v750
    %v766 = vadd.f32 %v765, %v751
    %v767 = vadd.f32 %v766, %v752
    %v768 = vadd.f32 %v767, %v753
    %v769 = vadd.f32 %v768, %v754
    %v770 = vadd.f32 %v769, %v755
    %v771 = vadd.f32 %v770, %v756
    %v772 = vadd.f32 %v771, %v757
    %v773 = vadd.f32 %v772, %v758
    %v774 = vadd.f32 %v773, %v759
    %v775 = vadd.f32 %v774, %v760
    %v776 = vrot.slane %v775, 4
    %v777 = vadd.f32 %v775, %v776
    %v778 = vrot.slane %v777, 2
    %v779 = vadd.f32 %v777, %v778
    %v780 = vrot.slane %v779, 1
    %v781 = vadd.f32 %v779, %v780
    %v782 = vld [vmem:[#allocation2] sm:$0x1]
    %784 = vset.pattern.permute.xlu0 0
    %785 = vperm.xlu0 %784, %v782
    %v786 = vpop.permute.xlu0 %785
    %v788 = vlaneseq
    %v789 = vshrl.u32 %v788, 7
    %v790 = vsub.s32 0, %v789
    %v791 = vrot.slane %v786, %v790
    %v792 = vadd.f32 %v781, %v791
    %793 = vst [vmem:[#allocation3] sm:$0x1] %v792
    // Predicated region
    $region30: #{tpu_custom_call.1} parent=1 // pred_check
      _
    $region31: #{tpu_custom_call.1} parent=1 // pred_check_branch
      %795 = sbr.rel (0) target = $region33
    $region32: #{tpu_custom_call.1} parent=1 // pred_region
      %s797 = ssub.s32 16, 16
      %798 = vsyncadd [#allocation4], %s797
      %s800 = sshll.u32 [#allocation3], 4
      %s801 = int_to_ptr.vmem [resolvable:$true] %s800
      %803 = dma.vmem_to_hbm [thread:$0]  %s801, 16, %s7, [#allocation4]
    $region33: #{tpu_custom_call.1} parent=1 // pred_fallthru
      _
    // Predicated region
    $region34: #{tpu_custom_call.1} parent=1 // pred_check
      _
    $region35: #{tpu_custom_call.1} parent=1 // pred_check_branch
      %805 = sbr.rel (0) target = $region37
    $region36: #{tpu_custom_call.1} parent=1 // pred_region
      %806 = dma.done [#allocation4], 16
    $region37: #{tpu_custom_call.1} parent=1 // pred_fallthru
      _
    %807 = vsyncpa [#allocation4], 1

</llo_original>
